<compile_context>
chip_gen: v7x
topology: tpu7x:2x2x1
jax: 0.10.0
libtpu: 0.0.40
codegen_flags: <defaults>
</compile_context>

<pallas_src>
import math
import functools

import numpy as np
import jax
import jax.numpy as jnp
from jax import lax
from jax.experimental import pallas as pl
from jax.experimental.pallas import tpu as pltpu


def _mlstm_head_kernel(q_ref, k_ref, v_ref, ccol_ref, crow_ref, ig_ref, lnw_ref,
                       out_ref, m_sc, s_sc, acc_sc,
                       *, scale, eps, ln_eps):
    """One (batch, head) pair; grid axis 2 walks key-dimension chunks."""
    kv = pl.program_id(2)
    nkv = pl.num_programs(2)

    @pl.when(kv == 0)
    def _init():
        m_sc[...] = jnp.full_like(m_sc, -jnp.inf)
        s_sc[...] = jnp.zeros_like(s_sc)
        acc_sc[...] = jnp.zeros_like(acc_sc)

    q = q_ref[0, 0]                              # (S, DH)   native dtype
    k = k_ref[0, 0]                              # (SK, DH)  native dtype
    v = v_ref[0, 0]                              # (SK, DH)  native dtype
    ccol = ccol_ref[0, 0]                        # (S, 1)    f32  cumsum(logsig f)[i]
    crow = crow_ref[0, 0]                        # (1, SK)   f32  cumsum(logsig f)[j]
    ig = ig_ref[0, 0]                            # (1, SK)   f32  igate preact[j]

    S, SK = q.shape[0], k.shape[0]

    # Causal mask for this key chunk (global column index).
    row = lax.broadcasted_iota(jnp.int32, (S, SK), 0)
    col = lax.broadcasted_iota(jnp.int32, (S, SK), 1) + kv * SK
    ltr = col <= row

    # log decay matrix chunk: csum[i] - csum[j] + igate[j], -inf above diagonal.
    log_d = jnp.where(ltr, (ccol - crow) + ig, -jnp.inf)          # (S, SK)

    # Flash-style online row-wise stabilization.
    m_prev = m_sc[...]                                            # (S, 1)
    m_new = jnp.maximum(m_prev, jnp.max(log_d, axis=-1, keepdims=True))
    alpha = jnp.exp(m_prev - m_new)                               # (S, 1)
    d_mat = jnp.exp(log_d - m_new)                                # (S, SK); 0 where masked

    qk = lax.dot_general(q, k, (((1,), (1,)), ((), ())),
                         preferred_element_type=jnp.float32) * scale
    c = qk * d_mat                                                # (S, SK) f32

    s_sc[...] = alpha * s_sc[...] + jnp.sum(c, axis=-1, keepdims=True)
    acc_sc[...] = alpha * acc_sc[...] + jnp.dot(
        c.astype(v.dtype), v, preferred_element_type=jnp.float32)
    m_sc[...] = m_new

    @pl.when(kv == nkv - 1)
    def _finalize():
        normalizer = jnp.maximum(jnp.abs(s_sc[...]), jnp.exp(-m_sc[...]))
        inv = pl.reciprocal(normalizer + eps, approx=True)        # per-row EUP recip
        h = acc_sc[...] * inv                                     # (S, DH)
        # MultiHeadLayerNorm == per-(token, head) group norm over DH.
        mean = jnp.mean(h, axis=-1, keepdims=True)
        var = jnp.mean(jnp.square(h - mean), axis=-1, keepdims=True)
        hn = (h - mean) * lax.rsqrt(var + ln_eps)
        out_ref[0, 0] = (hn * lnw_ref[0]).astype(out_ref.dtype)


def _pick_key_chunk(S, key_chunk=None):
    if key_chunk is not None:
        assert S % key_chunk == 0, "key_chunk must divide S"
        return key_chunk
    if S > 512 and S % 512 == 0:
        return 512
    if S > 256 and S % 256 == 0:
        return 256
    if S > 128 and S % 128 == 0:
        return 128
    return S


def _default_vmem_limit_bytes():
    try:
        kind = jax.devices()[0].device_kind.lower()
    except Exception:
        kind = ""
    if "v7" in kind or "7x" in kind:
        return 48 * 1024 * 1024      # v7x: 64 MiB physical per TensorCore
    return 100 * 1024 * 1024         # v5e / v6e: 128 MiB physical


def matrix_lstm_cell(q, k, v, wi_t, bi, wf_t, bf, ln_w, *, num_heads, key_chunk=None):
    """q, k, v: (B, S, D); gate weights pre-transposed to (3D, NH)."""
    B, S, D = q.shape
    assert D % num_heads == 0
    NH = num_heads
    DH = D // NH
    SK = _pick_key_chunk(S, key_chunk)
    nkv = S // SK

    # ---- tiny gate pre-computation, kept in XLA (not the kernel) ----
    x = jnp.concatenate([q, k, v], axis=-1)                              # (B, S, 3D)
    ig = jnp.dot(x, wi_t, preferred_element_type=jnp.float32) + bi.astype(jnp.float32)
    fg = jnp.dot(x, wf_t, preferred_element_type=jnp.float32) + bf.astype(jnp.float32)
    log_fg = jax.nn.log_sigmoid(fg)                                      # (B, S, NH)
    csum = jnp.cumsum(log_fg, axis=1)                                    # inclusive

    # ---- head-major layouts: the BlockSpec DMA does the head split ----
    def to_heads(t):
        return t.reshape(B, S, NH, DH).transpose(0, 2, 1, 3)             # (B, NH, S, DH)

    q4, k4, v4 = to_heads(q), to_heads(k), to_heads(v)
    ccol = csum.transpose(0, 2, 1)[..., None]                            # (B, NH, S, 1)
    crow = csum.transpose(0, 2, 1)[:, :, None, :]                        # (B, NH, 1, S)
    igr = ig.transpose(0, 2, 1)[:, :, None, :]                           # (B, NH, 1, S)
    lnw = (1.0 + ln_w.astype(jnp.float32)).reshape(NH, 1, DH)            # residual weight

    kernel = functools.partial(_mlstm_head_kernel,
                               scale=1.0 / math.sqrt(DH),
                               eps=1e-6, ln_eps=1e-5)

    out4 = pl.pallas_call(
        kernel,
        out_shape=jax.ShapeDtypeStruct((B, NH, S, DH), q.dtype),
        grid=(B, NH, nkv),
        in_specs=[
            pl.BlockSpec((1, 1, S, DH), lambda b, h, c: (b, h, 0, 0)),   # q (full seq)
            pl.BlockSpec((1, 1, SK, DH), lambda b, h, c: (b, h, c, 0)),  # k chunk
            pl.BlockSpec((1, 1, SK, DH), lambda b, h, c: (b, h, c, 0)),  # v chunk
            pl.BlockSpec((1, 1, S, 1), lambda b, h, c: (b, h, 0, 0)),    # fgate csum (col)
            pl.BlockSpec((1, 1, 1, SK), lambda b, h, c: (b, h, 0, c)),   # fgate csum (row)
            pl.BlockSpec((1, 1, 1, SK), lambda b, h, c: (b, h, 0, c)),   # igate preact (row)
            pl.BlockSpec((1, 1, DH), lambda b, h, c: (h, 0, 0)),         # 1 + outnorm weight
        ],
        out_specs=pl.BlockSpec((1, 1, S, DH), lambda b, h, c: (b, h, 0, 0)),
        scratch_shapes=[
            pltpu.VMEM((S, 1), jnp.float32),      # running row max of log_D
            pltpu.VMEM((S, 1), jnp.float32),      # running signed row sum of C
            pltpu.VMEM((S, DH), jnp.float32),     # running C @ V accumulator
        ],
        compiler_params=pltpu.CompilerParams(
            dimension_semantics=("parallel", "parallel", "arbitrary"),
            vmem_limit_bytes=_default_vmem_limit_bytes(),
        ),
    )(q4, k4, v4, ccol, crow, igr, lnw)

    return out4.transpose(0, 2, 1, 3).reshape(B, S, D)


def reference_jax(q, k, v, wi_t, bi, wf_t, bf, ln_w, *, num_heads):
    """Pure-JAX transcription of the PyTorch forward, for validation."""
    B, S, D = q.shape
    DH = D // num_heads
    x = jnp.concatenate([q, k, v], axis=-1)
    ig = x @ wi_t + bi
    fg = x @ wf_t + bf
    qh = q.reshape(B, S, num_heads, DH).transpose(0, 2, 1, 3)
    kh = k.reshape(B, S, num_heads, DH).transpose(0, 2, 1, 3)
    vh = v.reshape(B, S, num_heads, DH).transpose(0, 2, 1, 3)
    ig = ig.transpose(0, 2, 1)[..., None]
    fg = fg.transpose(0, 2, 1)[..., None]
    log_fg = jax.nn.log_sigmoid(fg)
    csum = jnp.concatenate(
        [jnp.zeros((B, num_heads, 1, 1), q.dtype), jnp.cumsum(log_fg, axis=-2)], axis=-2)
    mat = csum - jnp.swapaxes(csum, -2, -1)
    ltr = jnp.tril(jnp.ones((S, S), dtype=bool))
    log_fg_mat = jnp.where(ltr, mat[..., 1:, 1:], -jnp.inf)
    log_D = log_fg_mat + jnp.swapaxes(ig, -2, -1)
    max_log_D = jnp.max(log_D, axis=-1, keepdims=True)
    D_mat = jnp.exp(log_D - max_log_D)
    qk = qh @ jnp.swapaxes(kh / math.sqrt(DH), -2, -1)
    C = qk * D_mat
    normalizer = jnp.maximum(jnp.abs(C.sum(-1, keepdims=True)), jnp.exp(-max_log_D))
    Cn = C / (normalizer + 1e-6)
    h = Cn @ vh
    mean = h.mean(-1, keepdims=True)
    var = ((h - mean) ** 2).mean(-1, keepdims=True)
    hn = (h - mean) / jnp.sqrt(var + 1e-5)
    w = (1.0 + ln_w).reshape(num_heads, DH)[None, :, None, :]
    return (hn * w).transpose(0, 2, 1, 3).reshape(B, S, D)


if __name__ == "__main__":
    # ---- case 1: small shapes matching the module spec ----
    B, S, dim, num_heads = 2, 16, 32, 4
    key = jax.random.PRNGKey(0)
    kq, kk, kv_, kwi, kbi, kwf, kln = jax.random.split(key, 7)
    q = jax.random.normal(kq, (B, S, dim), jnp.float32)
    k = jax.random.normal(kk, (B, S, dim), jnp.float32)
    v = jax.random.normal(kv_, (B, S, dim), jnp.float32)

    # Gate / norm parameters (small random gate weights to exercise the full
    # data path; biases follow MatrixLSTMCell.reset_parameters).
    wi_t = 0.05 * jax.random.normal(kwi, (3 * dim, num_heads), jnp.float32)
    bi = 0.1 * jax.random.normal(kbi, (num_heads,), jnp.float32)
    wf_t = 0.05 * jax.random.normal(kwf, (3 * dim, num_heads), jnp.float32)
    bf = jnp.linspace(3.0, 6.0, num_heads, dtype=jnp.float32)
    ln_w = 0.1 * jax.random.normal(kln, (dim,), jnp.float32)

    out = matrix_lstm_cell(q, k, v, wi_t, bi, wf_t, bf, ln_w, num_heads=num_heads)
    out = jax.block_until_ready(out)
    ref = reference_jax(q, k, v, wi_t, bi, wf_t, bf, ln_w, num_heads=num_heads)
    np.testing.assert_allclose(np.asarray(out), np.asarray(ref), rtol=1e-3, atol=1e-3)

    # ---- case 2: exercises the chunked ("arbitrary") key-dimension axis ----
    B2, S2, dim2, nh2 = 1, 256, 64, 4
    key2 = jax.random.PRNGKey(1)
    kq2, kk2, kv2, kbi2, kln2 = jax.random.split(key2, 5)
    q2 = jax.random.normal(kq2, (B2, S2, dim2), jnp.float32)
    k2 = jax.random.normal(kk2, (B2, S2, dim2), jnp.float32)
    v2 = jax.random.normal(kv2, (B2, S2, dim2), jnp.float32)
    wi2 = jnp.zeros((3 * dim2, nh2), jnp.float32)
    bi2 = 0.1 * jax.random.normal(kbi2, (nh2,), jnp.float32)
    wf2 = jnp.zeros((3 * dim2, nh2), jnp.float32)
    bf2 = jnp.linspace(3.0, 6.0, nh2, dtype=jnp.float32)
    ln2 = 0.1 * jax.random.normal(kln2, (dim2,), jnp.float32)

    out2 = matrix_lstm_cell(q2, k2, v2, wi2, bi2, wf2, bf2, ln2,
                            num_heads=nh2, key_chunk=128)   # 2 key chunks
    out2 = jax.block_until_ready(out2)
    ref2 = reference_jax(q2, k2, v2, wi2, bi2, wf2, bf2, ln2, num_heads=nh2)
    np.testing.assert_allclose(np.asarray(out2), np.asarray(ref2), rtol=1e-3, atol=1e-3)

    print("KERNEL_OK")
</pallas_src>

<mosaic_0001>
module attributes {stable_mosaic.version = 11 : i64} {
  func.func @_mlstm_head_kernel(%arg0: i32, %arg1: i32, %arg2: i32, %arg3: memref<1x1x16x8xf32, #tpu.memory_space<vmem>>, %arg4: memref<1x1x16x8xf32, #tpu.memory_space<vmem>>, %arg5: memref<1x1x16x8xf32, #tpu.memory_space<vmem>>, %arg6: memref<1x1x16x1xf32, #tpu.memory_space<vmem>>, %arg7: memref<1x1x1x16xf32, #tpu.memory_space<vmem>>, %arg8: memref<1x1x1x16xf32, #tpu.memory_space<vmem>>, %arg9: memref<1x1x8xf32, #tpu.memory_space<vmem>>, %arg10: memref<1x1x16x8xf32, #tpu.memory_space<vmem>>, %arg11: memref<16x1xf32, #tpu.memory_space<vmem>>, %arg12: memref<16x1xf32, #tpu.memory_space<vmem>>, %arg13: memref<16x8xf32, #tpu.memory_space<vmem>>) attributes {dimension_semantics = [#tpu.dimension_semantics<parallel>, #tpu.dimension_semantics<parallel>, #tpu.dimension_semantics<arbitrary>], iteration_bounds = array<i64: 2, 4, 1>, scalar_prefetch = 0 : i64, scratch_operands = 3 : i64, tpu.core_type = #tpu.core_type<tc>, window_params = [{transform_indices = @transform_0, window_bounds = array<i64: 1, 1, 16, 8>}, {transform_indices = @transform_1, window_bounds = array<i64: 1, 1, 16, 8>}, {transform_indices = @transform_2, window_bounds = array<i64: 1, 1, 16, 8>}, {transform_indices = @transform_3, window_bounds = array<i64: 1, 1, 16, 1>}, {transform_indices = @transform_4, window_bounds = array<i64: 1, 1, 1, 16>}, {transform_indices = @transform_5, window_bounds = array<i64: 1, 1, 1, 16>}, {transform_indices = @transform_6, window_bounds = array<i64: 1, 1, 8>}, {transform_indices = @transform_7, window_bounds = array<i64: 1, 1, 16, 8>}]} {
    %c0_i32 = arith.constant 0 : i32
    %0 = arith.cmpi eq, %arg2, %c0_i32 : i32
    %1 = arith.extui %0 : i1 to i32
    %c0_i32_0 = arith.constant 0 : i32
    %2 = arith.cmpi ne, %1, %c0_i32_0 : i32
    scf.if %2 {
      %cst_43 = arith.constant 0xFF800000 : f32
      %57 = vector.broadcast %cst_43 : f32 to vector<16x1xf32>
      %c0_44 = arith.constant 0 : index
      %c0_45 = arith.constant 0 : index
      %58 = vector.load %arg11[%c0_44, %c0_45] : memref<16x1xf32, #tpu.memory_space<vmem>>, vector<16x1xf32>
      tpu.vector_store %arg11[%c0_44, %c0_45], %57 {strides = array<i32>} : memref<16x1xf32, #tpu.memory_space<vmem>>, vector<16x1xf32>,
      %cst_46 = arith.constant 0.000000e+00 : f32
      %59 = vector.broadcast %cst_46 : f32 to vector<16x1xf32>
      %c0_47 = arith.constant 0 : index
      %c0_48 = arith.constant 0 : index
      %60 = vector.load %arg12[%c0_47, %c0_48] : memref<16x1xf32, #tpu.memory_space<vmem>>, vector<16x1xf32>
      tpu.vector_store %arg12[%c0_47, %c0_48], %59 {strides = array<i32>} : memref<16x1xf32, #tpu.memory_space<vmem>>, vector<16x1xf32>,
      %cst_49 = arith.constant 0.000000e+00 : f32
      %61 = vector.broadcast %cst_49 : f32 to vector<16x8xf32>
      %c0_50 = arith.constant 0 : index
      %c0_51 = arith.constant 0 : index
      %62 = vector.load %arg13[%c0_50, %c0_51] : memref<16x8xf32, #tpu.memory_space<vmem>>, vector<16x8xf32>
      tpu.vector_store %arg13[%c0_50, %c0_51], %61 {strides = array<i32>} : memref<16x8xf32, #tpu.memory_space<vmem>>, vector<16x8xf32>,
    } else {
    }
    %c0 = arith.constant 0 : index
    %c0_1 = arith.constant 0 : index
    %c0_2 = arith.constant 0 : index
    %c0_3 = arith.constant 0 : index
    %3 = vector.load %arg3[%c0, %c0_1, %c0_2, %c0_3] : memref<1x1x16x8xf32, #tpu.memory_space<vmem>>, vector<1x1x16x8xf32>
    %4 = vector.shape_cast %3 : vector<1x1x16x8xf32> to vector<16x8xf32>
    %c0_4 = arith.constant 0 : index
    %c0_5 = arith.constant 0 : index
    %c0_6 = arith.constant 0 : index
    %c0_7 = arith.constant 0 : index
    %5 = vector.load %arg4[%c0_4, %c0_5, %c0_6, %c0_7] : memref<1x1x16x8xf32, #tpu.memory_space<vmem>>, vector<1x1x16x8xf32>
    %6 = vector.shape_cast %5 : vector<1x1x16x8xf32> to vector<16x8xf32>
    %c0_8 = arith.constant 0 : index
    %c0_9 = arith.constant 0 : index
    %c0_10 = arith.constant 0 : index
    %c0_11 = arith.constant 0 : index
    %7 = vector.load %arg5[%c0_8, %c0_9, %c0_10, %c0_11] : memref<1x1x16x8xf32, #tpu.memory_space<vmem>>, vector<1x1x16x8xf32>
    %8 = vector.shape_cast %7 : vector<1x1x16x8xf32> to vector<16x8xf32>
    %c0_12 = arith.constant 0 : index
    %c0_13 = arith.constant 0 : index
    %c0_14 = arith.constant 0 : index
    %c0_15 = arith.constant 0 : index
    %9 = vector.load %arg6[%c0_12, %c0_13, %c0_14, %c0_15] : memref<1x1x16x1xf32, #tpu.memory_space<vmem>>, vector<1x1x16x1xf32>
    %10 = vector.shape_cast %9 : vector<1x1x16x1xf32> to vector<16x1xf32>
    %c0_16 = arith.constant 0 : index
    %c0_17 = arith.constant 0 : index
    %c0_18 = arith.constant 0 : index
    %c0_19 = arith.constant 0 : index
    %11 = vector.load %arg7[%c0_16, %c0_17, %c0_18, %c0_19] : memref<1x1x1x16xf32, #tpu.memory_space<vmem>>, vector<1x1x1x16xf32>
    %12 = vector.shape_cast %11 : vector<1x1x1x16xf32> to vector<1x16xf32>
    %c0_20 = arith.constant 0 : index
    %c0_21 = arith.constant 0 : index
    %c0_22 = arith.constant 0 : index
    %c0_23 = arith.constant 0 : index
    %13 = vector.load %arg8[%c0_20, %c0_21, %c0_22, %c0_23] : memref<1x1x1x16xf32, #tpu.memory_space<vmem>>, vector<1x1x1x16xf32>
    %14 = vector.shape_cast %13 : vector<1x1x1x16xf32> to vector<1x16xf32>
    %15 = tpu.iota {dimensions = array<i32: 0>} : vector<16x16xi32>
    %16 = tpu.iota {dimensions = array<i32: 1>} : vector<16x16xi32>
    %c16_i32 = arith.constant 16 : i32
    %17 = arith.muli %arg2, %c16_i32 : i32
    %18 = vector.broadcast %17 : i32 to vector<16x16xi32>
    %19 = arith.addi %16, %18 : vector<16x16xi32>
    %20 = arith.cmpi sle, %19, %15 : vector<16x16xi32>
    %21 = vector.broadcast %10 : vector<16x1xf32> to vector<16x16xf32>
    %22 = vector.broadcast %12 : vector<1x16xf32> to vector<16x16xf32>
    %23 = arith.subf %21, %22 : vector<16x16xf32>
    %24 = vector.broadcast %14 : vector<1x16xf32> to vector<16x16xf32>
    %25 = arith.addf %23, %24 : vector<16x16xf32>
    %cst = arith.constant 0xFF800000 : f32
    %26 = vector.broadcast %cst : f32 to vector<16x16xf32>
    %27 = arith.select %20, %25, %26 : vector<16x16xi1>, vector<16x16xf32>
    %c0_24 = arith.constant 0 : index
    %c0_25 = arith.constant 0 : index
    %28 = vector.load %arg11[%c0_24, %c0_25] : memref<16x1xf32, #tpu.memory_space<vmem>>, vector<16x1xf32>
    %cst_26 = arith.constant dense<0xFF800000> : vector<16xf32>
    %29 = vector.multi_reduction <maximumf>, %27, %cst_26 [1] : vector<16x16xf32> to vector<16xf32>
    %30 = vector.shape_cast %29 : vector<16xf32> to vector<16x1xf32>
    %31 = arith.maximumf %28, %30 : vector<16x1xf32>
    %32 = arith.subf %28, %31 : vector<16x1xf32>
    %33 = math.exp %32 : vector<16x1xf32>
    %34 = vector.broadcast %31 : vector<16x1xf32> to vector<16x16xf32>
    %35 = arith.subf %27, %34 : vector<16x16xf32>
    %36 = math.exp %35 : vector<16x16xf32>
    %cst_27 = arith.constant dense<0.000000e+00> : vector<16x16xf32>
    %37 = tpu.matmul %4, %6, %cst_27 {dimension_numbers = #tpu.dot_dimension_numbers<[1], [1], [0], [0], [0, 0, 1, 0], [], []>} : vector<16x8xf32>, vector<16x8xf32>, vector<16x16xf32> -> vector<16x16xf32>
    %cst_28 = arith.constant 0.353553385 : f32
    %38 = vector.broadcast %cst_28 : f32 to vector<16x16xf32>
    %39 = arith.mulf %37, %38 : vector<16x16xf32>
    %40 = arith.mulf %39, %36 : vector<16x16xf32>
    %c0_29 = arith.constant 0 : index
    %c0_30 = arith.constant 0 : index
    %41 = vector.load %arg12[%c0_29, %c0_30] : memref<16x1xf32, #tpu.memory_space<vmem>>, vector<16x1xf32>
    %42 = arith.mulf %33, %41 : vector<16x1xf32>
    %cst_31 = arith.constant dense<0.000000e+00> : vector<16xf32>
    %43 = vector.multi_reduction <add>, %40, %cst_31 [1] : vector<16x16xf32> to vector<16xf32>
    %44 = vector.shape_cast %43 : vector<16xf32> to vector<16x1xf32>
    %45 = arith.addf %42, %44 : vector<16x1xf32>
    %c0_32 = arith.constant 0 : index
    %c0_33 = arith.constant 0 : index
    %46 = vector.load %arg12[%c0_32, %c0_33] : memref<16x1xf32, #tpu.memory_space<vmem>>, vector<16x1xf32>
    tpu.vector_store %arg12[%c0_32, %c0_33], %45 {strides = array<i32>} : memref<16x1xf32, #tpu.memory_space<vmem>>, vector<16x1xf32>,
    %c0_34 = arith.constant 0 : index
    %c0_35 = arith.constant 0 : index
    %47 = vector.load %arg13[%c0_34, %c0_35] : memref<16x8xf32, #tpu.memory_space<vmem>>, vector<16x8xf32>
    %48 = vector.broadcast %33 : vector<16x1xf32> to vector<16x8xf32>
    %49 = arith.mulf %48, %47 : vector<16x8xf32>
    %cst_36 = arith.constant dense<0.000000e+00> : vector<16x8xf32>
    %50 = tpu.matmul %40, %8, %cst_36 {dimension_numbers = #tpu.dot_dimension_numbers<[1], [0], [0], [1], [0, 0, 1, 1], [], []>} : vector<16x16xf32>, vector<16x8xf32>, vector<16x8xf32> -> vector<16x8xf32>
    %51 = arith.addf %49, %50 : vector<16x8xf32>
    %c0_37 = arith.constant 0 : index
    %c0_38 = arith.constant 0 : index
    %52 = vector.load %arg13[%c0_37, %c0_38] : memref<16x8xf32, #tpu.memory_space<vmem>>, vector<16x8xf32>
    tpu.vector_store %arg13[%c0_37, %c0_38], %51 {strides = array<i32>} : memref<16x8xf32, #tpu.memory_space<vmem>>, vector<16x8xf32>,
    %c0_39 = arith.constant 0 : index
    %c0_40 = arith.constant 0 : index
    %53 = vector.load %arg11[%c0_39, %c0_40] : memref<16x1xf32, #tpu.memory_space<vmem>>, vector<16x1xf32>
    tpu.vector_store %arg11[%c0_39, %c0_40], %31 {strides = array<i32>} : memref<16x1xf32, #tpu.memory_space<vmem>>, vector<16x1xf32>,
    %c0_i32_41 = arith.constant 0 : i32
    %54 = arith.cmpi eq, %arg2, %c0_i32_41 : i32
    %55 = arith.extui %54 : i1 to i32
    %c0_i32_42 = arith.constant 0 : i32
    %56 = arith.cmpi ne, %55, %c0_i32_42 : i32
    scf.if %56 {
      %c0_43 = arith.constant 0 : index
      %c0_44 = arith.constant 0 : index
      %57 = vector.load %arg12[%c0_43, %c0_44] : memref<16x1xf32, #tpu.memory_space<vmem>>, vector<16x1xf32>
      %58 = math.absf %57 : vector<16x1xf32>
      %c0_45 = arith.constant 0 : index
      %c0_46 = arith.constant 0 : index
      %59 = vector.load %arg11[%c0_45, %c0_46] : memref<16x1xf32, #tpu.memory_space<vmem>>, vector<16x1xf32>
      %cst_47 = arith.constant 0.000000e+00 : f32
      %60 = vector.broadcast %cst_47 : f32 to vector<16x1xf32>
      %61 = arith.subf %60, %59 : vector<16x1xf32>
      %62 = math.exp %61 : vector<16x1xf32>
      %63 = arith.maximumf %58, %62 : vector<16x1xf32>
      %cst_48 = arith.constant 9.99999997E-7 : f32
      %64 = vector.broadcast %cst_48 : f32 to vector<16x1xf32>
      %65 = arith.addf %63, %64 : vector<16x1xf32>
      %66 = tpu.reciprocal %65 {approx = true} : vector<16x1xf32> -> vector<16x1xf32>
      %c0_49 = arith.constant 0 : index
      %c0_50 = arith.constant 0 : index
      %67 = vector.load %arg13[%c0_49, %c0_50] : memref<16x8xf32, #tpu.memory_space<vmem>>, vector<16x8xf32>
      %68 = vector.broadcast %66 : vector<16x1xf32> to vector<16x8xf32>
      %69 = arith.mulf %67, %68 : vector<16x8xf32>
      %cst_51 = arith.constant dense<0.000000e+00> : vector<16xf32>
      %70 = vector.multi_reduction <add>, %69, %cst_51 [1] : vector<16x8xf32> to vector<16xf32>
      %71 = vector.shape_cast %70 : vector<16xf32> to vector<16x1xf32>
      %cst_52 = arith.constant 8.000000e+00 : f32
      %72 = vector.broadcast %cst_52 : f32 to vector<16x1xf32>
      %73 = arith.divf %71, %72 : vector<16x1xf32>
      %74 = vector.broadcast %73 : vector<16x1xf32> to vector<16x8xf32>
      %75 = arith.subf %69, %74 : vector<16x8xf32>
      %76 = arith.mulf %75, %75 : vector<16x8xf32>
      %cst_53 = arith.constant dense<0.000000e+00> : vector<16xf32>
      %77 = vector.multi_reduction <add>, %76, %cst_53 [1] : vector<16x8xf32> to vector<16xf32>
      %78 = vector.shape_cast %77 : vector<16xf32> to vector<16x1xf32>
      %cst_54 = arith.constant 8.000000e+00 : f32
      %79 = vector.broadcast %cst_54 : f32 to vector<16x1xf32>
      %80 = arith.divf %78, %79 : vector<16x1xf32>
      %81 = vector.broadcast %73 : vector<16x1xf32> to vector<16x8xf32>
      %82 = arith.subf %69, %81 : vector<16x8xf32>
      %cst_55 = arith.constant 9.99999974E-6 : f32
      %83 = vector.broadcast %cst_55 : f32 to vector<16x1xf32>
      %84 = arith.addf %80, %83 : vector<16x1xf32>
      %85 = math.rsqrt %84 : vector<16x1xf32>
      %86 = vector.broadcast %85 : vector<16x1xf32> to vector<16x8xf32>
      %87 = arith.mulf %82, %86 : vector<16x8xf32>
      %c0_56 = arith.constant 0 : index
      %c0_57 = arith.constant 0 : index
      %c0_58 = arith.constant 0 : index
      %88 = vector.load %arg9[%c0_56, %c0_57, %c0_58] : memref<1x1x8xf32, #tpu.memory_space<vmem>>, vector<1x1x8xf32>
      %89 = vector.shape_cast %88 : vector<1x1x8xf32> to vector<1x8xf32>
      %90 = vector.broadcast %89 : vector<1x8xf32> to vector<16x8xf32>
      %91 = arith.mulf %87, %90 : vector<16x8xf32>
      %c0_59 = arith.constant 0 : index
      %c0_60 = arith.constant 0 : index
      %c0_61 = arith.constant 0 : index
      %c0_62 = arith.constant 0 : index
      %92 = vector.load %arg10[%c0_59, %c0_60, %c0_61, %c0_62] : memref<1x1x16x8xf32, #tpu.memory_space<vmem>>, vector<1x1x16x8xf32>
      %93 = vector.shape_cast %92 : vector<1x1x16x8xf32> to vector<16x8xf32>
      %94 = vector.shape_cast %91 : vector<16x8xf32> to vector<1x1x16x8xf32>
      tpu.vector_store %arg10[%c0_59, %c0_60, %c0_61, %c0_62], %94 {strides = array<i32>} : memref<1x1x16x8xf32, #tpu.memory_space<vmem>>, vector<1x1x16x8xf32>,
    } else {
    }
    return
  }
  func.func @transform_0(%arg0: i32, %arg1: i32, %arg2: i32) -> (i32, i32, i32, i32) {
    %c0_i32 = arith.constant 0 : i32
    %c0_i32_0 = arith.constant 0 : i32
    %c0_i32_1 = arith.constant 0 : i32
    return %arg0, %arg1, %c0_i32, %c0_i32_0 : i32, i32, i32, i32
  }
  func.func @transform_1(%arg0: i32, %arg1: i32, %arg2: i32) -> (i32, i32, i32, i32) {
    %c0_i32 = arith.constant 0 : i32
    %c0_i32_0 = arith.constant 0 : i32
    return %arg0, %arg1, %arg2, %c0_i32 : i32, i32, i32, i32
  }
  func.func @transform_2(%arg0: i32, %arg1: i32, %arg2: i32) -> (i32, i32, i32, i32) {
    %c0_i32 = arith.constant 0 : i32
    %c0_i32_0 = arith.constant 0 : i32
    return %arg0, %arg1, %arg2, %c0_i32 : i32, i32, i32, i32
  }
  func.func @transform_3(%arg0: i32, %arg1: i32, %arg2: i32) -> (i32, i32, i32, i32) {
    %c0_i32 = arith.constant 0 : i32
    %c0_i32_0 = arith.constant 0 : i32
    %c0_i32_1 = arith.constant 0 : i32
    return %arg0, %arg1, %c0_i32, %c0_i32_0 : i32, i32, i32, i32
  }
  func.func @transform_4(%arg0: i32, %arg1: i32, %arg2: i32) -> (i32, i32, i32, i32) {
    %c0_i32 = arith.constant 0 : i32
    %c0_i32_0 = arith.constant 0 : i32
    return %arg0, %arg1, %c0_i32, %arg2 : i32, i32, i32, i32
  }
  func.func @transform_5(%arg0: i32, %arg1: i32, %arg2: i32) -> (i32, i32, i32, i32) {
    %c0_i32 = arith.constant 0 : i32
    %c0_i32_0 = arith.constant 0 : i32
    return %arg0, %arg1, %c0_i32, %arg2 : i32, i32, i32, i32
  }
  func.func @transform_6(%arg0: i32, %arg1: i32, %arg2: i32) -> (i32, i32, i32) {
    %c0_i32 = arith.constant 0 : i32
    %c0_i32_0 = arith.constant 0 : i32
    %c0_i32_1 = arith.constant 0 : i32
    return %arg1, %c0_i32, %c0_i32_0 : i32, i32, i32
  }
  func.func @transform_7(%arg0: i32, %arg1: i32, %arg2: i32) -> (i32, i32, i32, i32) {
    %c0_i32 = arith.constant 0 : i32
    %c0_i32_0 = arith.constant 0 : i32
    %c0_i32_1 = arith.constant 0 : i32
    return %arg0, %arg1, %c0_i32, %c0_i32_0 : i32, i32, i32, i32
  }
}

</mosaic_0001>

<llo_original>
// kernel: tpu_custom_call.1
$region0: #{tpu_custom_call.1}
  #allocation0 [shape = 'u32[]', space=smem, size = 0x4, offset = 0x4, fixed_abs, tag = 'smem constant byte address 0x4 - core index']
  #allocation1 [shape = 'u32[144,128]{1,0:T(1,128)}', space=vmem, size = 0x12000, scoped, tag = 'internal scratch']
  #allocation2 [shape = 'f32[16,1]{1,0:T(8,128)}', space=vmem, size = 0x2000, scoped, tag = 'scratch operand']
  #allocation3 [shape = 'f32[16,1]{1,0:T(8,128)}', space=vmem, size = 0x2000, scoped, tag = 'scratch operand']
  #allocation4 [shape = 'f32[16,8]{1,0:T(8,128)}', space=vmem, size = 0x2000, scoped, tag = 'scratch operand']
  %s0 = inlined_call_operand.hbm [shape: f32[2,4,16,8], index: 0, kind: input, shape index: {}]
  %s1 = inlined_call_operand.hbm [shape: f32[2,4,16,8], index: 1, kind: input, shape index: {}]
  %s2 = inlined_call_operand.hbm [shape: f32[2,4,16,8], index: 2, kind: input, shape index: {}]
  %s3 = inlined_call_operand.hbm [shape: f32[2,4,16,1], index: 3, kind: input, shape index: {}]
  %s4 = inlined_call_operand.hbm [shape: f32[2,4,1,16], index: 4, kind: input, shape index: {}]
  %s5 = inlined_call_operand.hbm [shape: f32[2,4,1,16], index: 5, kind: input, shape index: {}]
  %s6 = inlined_call_operand.hbm [shape: f32[4,1,8], index: 6, kind: input, shape index: {}]
  %s7 = inlined_call_operand.hbm [shape: f32[2,4,16,8], index: 7, kind: output, shape index: {}]
  %s8 = sld [smem:[#allocation0]]
  $region97: #{tpu_custom_call.1} parent=0
    _
  %s10 = ssub.s32 1, %s8
  %s11 = scalar_select 0, %s10, %s8
  $region1: #{tpu_custom_call.1} parent=0
    #allocation5 [shape = 'u8[16384]{0}', space=vmem, size = 0x4000, scoped, tag = 'input window, operand 0']
    #allocation6 [shape = 's32[2]{0}', space=sflag, size = 0x8, scoped, tag = 'scoped memory for tpu_custom_call.1']
    #allocation7 [shape = 's32[2]{0}', space=sflag, size = 0x8, scoped, tag = 'scoped memory for tpu_custom_call.1']
    #allocation8 [shape = 'u8[16384]{0}', space=vmem, size = 0x4000, scoped, tag = 'input window, operand 1']
    #allocation9 [shape = 's32[2]{0}', space=sflag, size = 0x8, scoped, tag = 'scoped memory for tpu_custom_call.1']
    #allocation10 [shape = 'u8[16384]{0}', space=vmem, size = 0x4000, scoped, tag = 'input window, operand 2']
    #allocation11 [shape = 'u8[16384]{0}', space=vmem, size = 0x4000, scoped, tag = 'input window, operand 3']
    #allocation12 [shape = 's32[2]{0}', space=sflag, size = 0x8, scoped, tag = 'scoped memory for tpu_custom_call.1']
    #allocation13 [shape = 'u8[1024]{0}', space=vmem, size = 0x400, scoped, tag = 'input window, operand 4']
    #allocation14 [shape = 'u8[1024]{0}', space=vmem, size = 0x400, scoped, tag = 'input window, operand 5']
    #allocation15 [shape = 's32[2]{0}', space=sflag, size = 0x8, scoped, tag = 'scoped memory for tpu_custom_call.1']
    #allocation16 [shape = 'u8[1024]{0}', space=vmem, size = 0x400, scoped, tag = 'input window, operand 6']
    #allocation17 [shape = 'u8[16384]{0}', space=vmem, size = 0x4000, scoped, tag = 'output window, operand 0']
    %12 = vsyncpa [#allocation6], 0
    %s13 = scalar_lea.sflag [#allocation6], 1
    %14 = vsyncpa %s13, 0
    %15 = vsyncpa [#allocation9], 0
    %s16 = scalar_lea.sflag [#allocation9], 1
    %17 = vsyncpa %s16, 0
    %18 = vsyncpa [#allocation12], 0
    %s19 = scalar_lea.sflag [#allocation12], 1
    %20 = vsyncpa %s19, 0
    %21 = vsyncpa [#allocation15], 0
    %s22 = scalar_lea.sflag [#allocation15], 1
    %23 = vsyncpa %s22, 0
    %24 = vsyncpa [#allocation7], 0
    %s25 = scalar_lea.sflag [#allocation7], 1
    %26 = vsyncpa %s25, 0
    loop: start=0, step=1, limit=10
    $region2: #{tpu_custom_call.1} parent=1 // loop_pre_header
      _
    $region3: #{tpu_custom_call.1} parent=1 // loop_header
      %s28 = sphi 0, %s32
      %p29 = scmp.ge.s32.totalorder %s28, 10
      %s35 = sphi 0, %s54
      %s36 = sphi 0, %s50
      %s37 = sphi 0, %s46
      %s38 = sphi 0, %s35
      %s39 = sphi 0, %s36
      %s40 = sphi 0, %s37
      %s41 = sphi 0, %s38
      %s42 = sphi 0, %s39
      %s43 = sphi 0, %s40
      %s59 = sphi 0, %s61
      %s62 = sphi 0, %s59
      %s63 = sphi 0, %s62
      %s79 = sphi 0, %s63
      %s89 = sphi 0, %s91
      %s92 = sphi 0, %s89
      %s93 = sphi 0, %s92
      %s109 = sphi 0, %s93
      %s119 = sphi 0, %s121
      %s122 = sphi 0, %s119
      %s123 = sphi 0, %s122
      %s139 = sphi 0, %s123
      %s147 = sphi 0, %s149
      %s150 = sphi 0, %s147
      %s151 = sphi 0, %s150
      %s167 = sphi 0, %s151
      %s177 = sphi 0, %s179
      %s180 = sphi 0, %s177
      %s181 = sphi 0, %s180
      %s197 = sphi 0, %s181
      %s207 = sphi 0, %s209
      %s210 = sphi 0, %s207
      %s211 = sphi 0, %s210
      %s227 = sphi 0, %s211
      %s233 = sphi 0, %s235
      %s236 = sphi 0, %s233
      %s237 = sphi 0, %s236
      %s253 = sphi 0, %s237
      %s261 = sphi 0, %s263
      %s264 = sphi 0, %s261
      %s265 = sphi 0, %s264
      %s281 = sphi 0, %s265
    $region4: #{tpu_custom_call.1} parent=1 // loop_header_branch
      %31 = sbr.rel (%p29) target = $region8
    $region5: #{tpu_custom_call.1} parent=1 // loop_body
      %s33 = ssub.s32 %s28, 1
      %s34 = ssub.s32 %s28, 2
      %s44 = sadd.s32 1, %s37
      %p45 = scmp.ge.s32.totalorder %s44, 1
      %s46 = scalar_select %p45, 0, %s44
      %s47 = sadd.s32 1, %s36
      %s48 = scalar_select %p45, %s47, %s36
      %p49 = scmp.ge.s32.totalorder %s48, 4
      %s50 = scalar_select %p49, 0, %s48
      %s51 = sadd.s32 1, %s35
      %s52 = scalar_select %p49, %s51, %s35
      %p53 = scmp.ge.s32.totalorder %s52, 2
      %s54 = scalar_select %p53, 0, %s52
      %s55 = ssub.s32 %s35, %s54
      %s56 = ssub.s32 %s36, %s50
      %s57 = sor.u32 %s55, %s56
      %p58 = scmp.eq.s32.totalorder %s57, 0
      %s60 = sadd.s32 %s59, 1
      %s61 = scalar_select %p58, %s59, %s60
      %p64 = pneg %p58
      %p65 = scmp.eq.s32.totalorder %s28, 7
      %p66 = por %p64, %p65
      %p67 = scmp.ne.s32.totalorder %s59, %s62
      %p68 = scmp.eq.s32.totalorder %s28, 0
      %p69 = por %p67, %p68
      %p70 = scmp.ne.s32.totalorder %s59, %s62
      %p71 = scmp.eq.s32.totalorder %s33, 7
      %p72 = por %p70, %p71
      %p73 = scmp.ne.s32.totalorder %s62, %s63
      %p74 = scmp.eq.s32.totalorder %s33, 0
      %p75 = por %p73, %p74
      %p76 = scmp.ne.s32.totalorder %s62, %s63
      %p77 = scmp.eq.s32.totalorder %s34, 7
      %p78 = por %p76, %p77
      %p80 = scmp.ne.s32.totalorder %s63, %s79
      %p81 = scmp.eq.s32.totalorder %s34, 0
      %p82 = por %p80, %p81
      %s83 = ssub.s32 %s35, %s54
      %s84 = ssub.s32 %s36, %s50
      %s85 = sor.u32 %s83, %s84
      %s86 = ssub.s32 %s37, %s46
      %s87 = sor.u32 %s85, %s86
      %p88 = scmp.eq.s32.totalorder %s87, 0
      %s90 = sadd.s32 %s89, 1
      %s91 = scalar_select %p88, %s89, %s90
      %p94 = pneg %p88
      %p95 = scmp.eq.s32.totalorder %s28, 7
      %p96 = por %p94, %p95
      %p97 = scmp.ne.s32.totalorder %s89, %s92
      %p98 = scmp.eq.s32.totalorder %s28, 0
      %p99 = por %p97, %p98
      %p100 = scmp.ne.s32.totalorder %s89, %s92
      %p101 = scmp.eq.s32.totalorder %s33, 7
      %p102 = por %p100, %p101
      %p103 = scmp.ne.s32.totalorder %s92, %s93
      %p104 = scmp.eq.s32.totalorder %s33, 0
      %p105 = por %p103, %p104
      %p106 = scmp.ne.s32.totalorder %s92, %s93
      %p107 = scmp.eq.s32.totalorder %s34, 7
      %p108 = por %p106, %p107
      %p110 = scmp.ne.s32.totalorder %s93, %s109
      %p111 = scmp.eq.s32.totalorder %s34, 0
      %p112 = por %p110, %p111
      %s113 = ssub.s32 %s35, %s54
      %s114 = ssub.s32 %s36, %s50
      %s115 = sor.u32 %s113, %s114
      %s116 = ssub.s32 %s37, %s46
      %s117 = sor.u32 %s115, %s116
      %p118 = scmp.eq.s32.totalorder %s117, 0
      %s120 = sadd.s32 %s119, 1
      %s121 = scalar_select %p118, %s119, %s120
      %p124 = pneg %p118
      %p125 = scmp.eq.s32.totalorder %s28, 7
      %p126 = por %p124, %p125
      %p127 = scmp.ne.s32.totalorder %s119, %s122
      %p128 = scmp.eq.s32.totalorder %s28, 0
      %p129 = por %p127, %p128
      %p130 = scmp.ne.s32.totalorder %s119, %s122
      %p131 = scmp.eq.s32.totalorder %s33, 7
      %p132 = por %p130, %p131
      %p133 = scmp.ne.s32.totalorder %s122, %s123
      %p134 = scmp.eq.s32.totalorder %s33, 0
      %p135 = por %p133, %p134
      %p136 = scmp.ne.s32.totalorder %s122, %s123
      %p137 = scmp.eq.s32.totalorder %s34, 7
      %p138 = por %p136, %p137
      %p140 = scmp.ne.s32.totalorder %s123, %s139
      %p141 = scmp.eq.s32.totalorder %s34, 0
      %p142 = por %p140, %p141
      %s143 = ssub.s32 %s35, %s54
      %s144 = ssub.s32 %s36, %s50
      %s145 = sor.u32 %s143, %s144
      %p146 = scmp.eq.s32.totalorder %s145, 0
      %s148 = sadd.s32 %s147, 1
      %s149 = scalar_select %p146, %s147, %s148
      %p152 = pneg %p146
      %p153 = scmp.eq.s32.totalorder %s28, 7
      %p154 = por %p152, %p153
      %p155 = scmp.ne.s32.totalorder %s147, %s150
      %p156 = scmp.eq.s32.totalorder %s28, 0
      %p157 = por %p155, %p156
      %p158 = scmp.ne.s32.totalorder %s147, %s150
      %p159 = scmp.eq.s32.totalorder %s33, 7
      %p160 = por %p158, %p159
      %p161 = scmp.ne.s32.totalorder %s150, %s151
      %p162 = scmp.eq.s32.totalorder %s33, 0
      %p163 = por %p161, %p162
      %p164 = scmp.ne.s32.totalorder %s150, %s151
      %p165 = scmp.eq.s32.totalorder %s34, 7
      %p166 = por %p164, %p165
      %p168 = scmp.ne.s32.totalorder %s151, %s167
      %p169 = scmp.eq.s32.totalorder %s34, 0
      %p170 = por %p168, %p169
      %s171 = ssub.s32 %s35, %s54
      %s172 = ssub.s32 %s36, %s50
      %s173 = sor.u32 %s171, %s172
      %s174 = ssub.s32 %s37, %s46
      %s175 = sor.u32 %s173, %s174
      %p176 = scmp.eq.s32.totalorder %s175, 0
      %s178 = sadd.s32 %s177, 1
      %s179 = scalar_select %p176, %s177, %s178
      %p182 = pneg %p176
      %p183 = scmp.eq.s32.totalorder %s28, 7
      %p184 = por %p182, %p183
      %p185 = scmp.ne.s32.totalorder %s177, %s180
      %p186 = scmp.eq.s32.totalorder %s28, 0
      %p187 = por %p185, %p186
      %p188 = scmp.ne.s32.totalorder %s177, %s180
      %p189 = scmp.eq.s32.totalorder %s33, 7
      %p190 = por %p188, %p189
      %p191 = scmp.ne.s32.totalorder %s180, %s181
      %p192 = scmp.eq.s32.totalorder %s33, 0
      %p193 = por %p191, %p192
      %p194 = scmp.ne.s32.totalorder %s180, %s181
      %p195 = scmp.eq.s32.totalorder %s34, 7
      %p196 = por %p194, %p195
      %p198 = scmp.ne.s32.totalorder %s181, %s197
      %p199 = scmp.eq.s32.totalorder %s34, 0
      %p200 = por %p198, %p199
      %s201 = ssub.s32 %s35, %s54
      %s202 = ssub.s32 %s36, %s50
      %s203 = sor.u32 %s201, %s202
      %s204 = ssub.s32 %s37, %s46
      %s205 = sor.u32 %s203, %s204
      %p206 = scmp.eq.s32.totalorder %s205, 0
      %s208 = sadd.s32 %s207, 1
      %s209 = scalar_select %p206, %s207, %s208
      %p212 = pneg %p206
      %p213 = scmp.eq.s32.totalorder %s28, 7
      %p214 = por %p212, %p213
      %p215 = scmp.ne.s32.totalorder %s207, %s210
      %p216 = scmp.eq.s32.totalorder %s28, 0
      %p217 = por %p215, %p216
      %p218 = scmp.ne.s32.totalorder %s207, %s210
      %p219 = scmp.eq.s32.totalorder %s33, 7
      %p220 = por %p218, %p219
      %p221 = scmp.ne.s32.totalorder %s210, %s211
      %p222 = scmp.eq.s32.totalorder %s33, 0
      %p223 = por %p221, %p222
      %p224 = scmp.ne.s32.totalorder %s210, %s211
      %p225 = scmp.eq.s32.totalorder %s34, 7
      %p226 = por %p224, %p225
      %p228 = scmp.ne.s32.totalorder %s211, %s227
      %p229 = scmp.eq.s32.totalorder %s34, 0
      %p230 = por %p228, %p229
      %s231 = ssub.s32 %s36, %s50
      %p232 = scmp.eq.s32.totalorder %s231, 0
      %s234 = sadd.s32 %s233, 1
      %s235 = scalar_select %p232, %s233, %s234
      %p238 = pneg %p232
      %p239 = scmp.eq.s32.totalorder %s28, 7
      %p240 = por %p238, %p239
      %p241 = scmp.ne.s32.totalorder %s233, %s236
      %p242 = scmp.eq.s32.totalorder %s28, 0
      %p243 = por %p241, %p242
      %p244 = scmp.ne.s32.totalorder %s233, %s236
      %p245 = scmp.eq.s32.totalorder %s33, 7
      %p246 = por %p244, %p245
      %p247 = scmp.ne.s32.totalorder %s236, %s237
      %p248 = scmp.eq.s32.totalorder %s33, 0
      %p249 = por %p247, %p248
      %p250 = scmp.ne.s32.totalorder %s236, %s237
      %p251 = scmp.eq.s32.totalorder %s34, 7
      %p252 = por %p250, %p251
      %p254 = scmp.ne.s32.totalorder %s237, %s253
      %p255 = scmp.eq.s32.totalorder %s34, 0
      %p256 = por %p254, %p255
      %s257 = ssub.s32 %s35, %s54
      %s258 = ssub.s32 %s36, %s50
      %s259 = sor.u32 %s257, %s258
      %p260 = scmp.eq.s32.totalorder %s259, 0
      %s262 = sadd.s32 %s261, 1
      %s263 = scalar_select %p260, %s261, %s262
      %p266 = pneg %p260
      %p267 = scmp.eq.s32.totalorder %s28, 7
      %p268 = por %p266, %p267
      %p269 = scmp.ne.s32.totalorder %s261, %s264
      %p270 = scmp.eq.s32.totalorder %s28, 0
      %p271 = por %p269, %p270
      %p272 = scmp.ne.s32.totalorder %s261, %s264
      %p273 = scmp.eq.s32.totalorder %s33, 7
      %p274 = por %p272, %p273
      %p275 = scmp.ne.s32.totalorder %s264, %s265
      %p276 = scmp.eq.s32.totalorder %s33, 0
      %p277 = por %p275, %p276
      %p278 = scmp.ne.s32.totalorder %s264, %s265
      %p279 = scmp.eq.s32.totalorder %s34, 7
      %p280 = por %p278, %p279
      %p282 = scmp.ne.s32.totalorder %s265, %s281
      %p283 = scmp.eq.s32.totalorder %s34, 0
      %p284 = por %p282, %p283
      %p285 = scmp.le.s32.totalorder 1, %s28
      %p286 = scmp.lt.s32.totalorder %s28, 9
      %p287 = pnand %p285, %p286
      %p288 = pneg %p287
      // Predicated region
      $region9: #{tpu_custom_call.1} parent=5 // pred_check
        _
      $region10: #{tpu_custom_call.1} parent=5 // pred_check_branch
        %290 = sbr.rel (%p287) target = $region12
      $region11: #{tpu_custom_call.1} parent=5 // pred_region
        %s291 = ssub.s32 %s28, 1
      $region12: #{tpu_custom_call.1} parent=5 // pred_fallthru
        _
      %p292 = scmp.lt.s32.totalorder %s28, 8
      // Predicated region
      $region13: #{tpu_custom_call.1} parent=5 // pred_check
        %p293 = pneg %p292
      $region14: #{tpu_custom_call.1} parent=5 // pred_check_branch
        %295 = sbr.rel (%p293) target = $region16
      $region15: #{tpu_custom_call.1} parent=5 // pred_region
        // Predicated region
        $region17: #{tpu_custom_call.1} parent=15 // pred_check
          %p296 = pneg %p69
        $region18: #{tpu_custom_call.1} parent=15 // pred_check_branch
          %298 = sbr.rel (%p296) target = $region20
        $region19: #{tpu_custom_call.1} parent=15 // pred_region
          %s299 = sand.u32 %s59, 1
          %s300 = scalar_lea.sflag [#allocation6], %s299
          %s301 = sand.u32 %s59, 1
          %s302 = smul.addr %s301, 16
          %s303 = scalar_lea.vmem [#allocation5], %s302
          %s305 = ssub.s32 256, 256
          %306 = vsyncadd %s300, %s305
          %s307 = smul.addr %s36, 2
          %s308 = smul.addr %s35, 8
          %s309 = sadd.s32 %s307, %s308
          %s310 = smul.addr %s309, 128
          %s311 = scalar_lea.hbm %s0, %s310
          %s312 = sshll.u32 %s303, 4
          %s313 = int_to_ptr.vmem [resolvable:$true] %s312
          %318 = dma.hbm_to_vmem [thread:$0]  %s311, 256, %s313, %s300, 128, 128, 8
        $region20: #{tpu_custom_call.1} parent=15 // pred_fallthru
          _
        // Predicated region
        $region21: #{tpu_custom_call.1} parent=15 // pred_check
          %p319 = pneg %p99
        $region22: #{tpu_custom_call.1} parent=15 // pred_check_branch
          %321 = sbr.rel (%p319) target = $region24
        $region23: #{tpu_custom_call.1} parent=15 // pred_region
          %s322 = sand.u32 %s28, 1
          %s323 = scalar_lea.sflag [#allocation9], %s322
          %s324 = sand.u32 %s89, 1
          %s325 = smul.addr %s324, 16
          %s326 = scalar_lea.vmem [#allocation8], %s325
          %s327 = smul.u32 2, %s37
          %s329 = ssub.s32 256, 256
          %330 = vsyncadd %s323, %s329
          %s331 = smul.addr %s36, 2
          %s332 = sadd.s32 %s327, %s331
          %s333 = smul.addr %s35, 8
          %s334 = sadd.s32 %s332, %s333
          %s335 = smul.addr %s334, 128
          %s336 = scalar_lea.hbm %s1, %s335
          %s337 = sshll.u32 %s326, 4
          %s338 = int_to_ptr.vmem [resolvable:$true] %s337
          %343 = dma.hbm_to_vmem [thread:$0]  %s336, 256, %s338, %s323, 128, 128, 8
        $region24: #{tpu_custom_call.1} parent=15 // pred_fallthru
          _
        // Predicated region
        $region25: #{tpu_custom_call.1} parent=15 // pred_check
          %p344 = pneg %p129
        $region26: #{tpu_custom_call.1} parent=15 // pred_check_branch
          %346 = sbr.rel (%p344) target = $region28
        $region27: #{tpu_custom_call.1} parent=15 // pred_region
          %s347 = sand.u32 %s28, 1
          %s348 = scalar_lea.sflag [#allocation9], %s347
          %s349 = sand.u32 %s119, 1
          %s350 = smul.addr %s349, 16
          %s351 = scalar_lea.vmem [#allocation10], %s350
          %s352 = smul.u32 2, %s37
          %s354 = ssub.s32 256, 256
          %355 = vsyncadd %s348, %s354
          %s356 = smul.addr %s36, 2
          %s357 = sadd.s32 %s352, %s356
          %s358 = smul.addr %s35, 8
          %s359 = sadd.s32 %s357, %s358
          %s360 = smul.addr %s359, 128
          %s361 = scalar_lea.hbm %s2, %s360
          %s362 = sshll.u32 %s351, 4
          %s363 = int_to_ptr.vmem [resolvable:$true] %s362
          %368 = dma.hbm_to_vmem [thread:$0]  %s361, 256, %s363, %s348, 128, 128, 8
        $region28: #{tpu_custom_call.1} parent=15 // pred_fallthru
          _
        // Predicated region
        $region29: #{tpu_custom_call.1} parent=15 // pred_check
          %p369 = pneg %p157
        $region30: #{tpu_custom_call.1} parent=15 // pred_check_branch
          %371 = sbr.rel (%p369) target = $region32
        $region31: #{tpu_custom_call.1} parent=15 // pred_region
          %s372 = sand.u32 %s28, 1
          %s373 = scalar_lea.sflag [#allocation12], %s372
          %s374 = sand.u32 %s147, 1
          %s375 = smul.addr %s374, 16
          %s376 = scalar_lea.vmem [#allocation11], %s375
          %s378 = ssub.s32 256, 256
          %379 = vsyncadd %s373, %s378
          %s380 = smul.addr %s36, 2
          %s381 = smul.addr %s35, 8
          %s382 = sadd.s32 %s380, %s381
          %s383 = smul.addr %s382, 128
          %s384 = scalar_lea.hbm %s3, %s383
          %s385 = sshll.u32 %s376, 4
          %s386 = int_to_ptr.vmem [resolvable:$true] %s385
          %391 = dma.hbm_to_vmem [thread:$0]  %s384, 256, %s386, %s373, 128, 128, 8
        $region32: #{tpu_custom_call.1} parent=15 // pred_fallthru
          _
        // Predicated region
        $region33: #{tpu_custom_call.1} parent=15 // pred_check
          %p392 = pneg %p187
        $region34: #{tpu_custom_call.1} parent=15 // pred_check_branch
          %394 = sbr.rel (%p392) target = $region36
        $region35: #{tpu_custom_call.1} parent=15 // pred_region
          %s395 = sand.u32 %s28, 1
          %s396 = scalar_lea.sflag [#allocation12], %s395
          %s397 = sand.u32 %s177, 1
          %s398 = scalar_lea.vmem [#allocation13], %s397
          %s400 = ssub.s32 16, 16
          %401 = vsyncadd %s396, %s400
          %s402 = sadd.s32 %s37, %s36
          %s403 = smul.addr %s35, 4
          %s404 = sadd.s32 %s402, %s403
          %s405 = smul.addr %s404, 16
          %s406 = scalar_lea.hbm %s4, %s405
          %s408 = sshll.u32 %s398, 4
          %s409 = int_to_ptr.vmem [resolvable:$true] %s408
          %411 = dma.hbm_to_vmem [thread:$0]  %s406, 16, %s409, %s396
        $region36: #{tpu_custom_call.1} parent=15 // pred_fallthru
          _
        // Predicated region
        $region37: #{tpu_custom_call.1} parent=15 // pred_check
          %p412 = pneg %p217
        $region38: #{tpu_custom_call.1} parent=15 // pred_check_branch
          %414 = sbr.rel (%p412) target = $region40
        $region39: #{tpu_custom_call.1} parent=15 // pred_region
          %s415 = sand.u32 %s28, 1
          %s416 = scalar_lea.sflag [#allocation15], %s415
          %s417 = sand.u32 %s207, 1
          %s418 = scalar_lea.vmem [#allocation14], %s417
          %s420 = ssub.s32 16, 16
          %421 = vsyncadd %s416, %s420
          %s422 = sadd.s32 %s37, %s36
          %s423 = smul.addr %s35, 4
          %s424 = sadd.s32 %s422, %s423
          %s425 = smul.addr %s424, 16
          %s426 = scalar_lea.hbm %s5, %s425
          %s428 = sshll.u32 %s418, 4
          %s429 = int_to_ptr.vmem [resolvable:$true] %s428
          %431 = dma.hbm_to_vmem [thread:$0]  %s426, 16, %s429, %s416
        $region40: #{tpu_custom_call.1} parent=15 // pred_fallthru
          _
        // Predicated region
        $region41: #{tpu_custom_call.1} parent=15 // pred_check
          %p432 = pneg %p243
        $region42: #{tpu_custom_call.1} parent=15 // pred_check_branch
          %434 = sbr.rel (%p432) target = $region44
        $region43: #{tpu_custom_call.1} parent=15 // pred_region
          %s435 = sand.u32 %s28, 1
          %s436 = scalar_lea.sflag [#allocation15], %s435
          %s437 = sand.u32 %s233, 1
          %s438 = scalar_lea.vmem [#allocation16], %s437
          %s440 = ssub.s32 16, 16
          %441 = vsyncadd %s436, %s440
          %s442 = smul.addr %s36, 16
          %s443 = scalar_lea.hbm %s6, %s442
          %s445 = sshll.u32 %s438, 4
          %s446 = int_to_ptr.vmem [resolvable:$true] %s445
          %448 = dma.hbm_to_vmem [thread:$0]  %s443, 16, %s446, %s436
        $region44: #{tpu_custom_call.1} parent=15 // pred_fallthru
          _
      $region16: #{tpu_custom_call.1} parent=5 // pred_fallthru
        _
      %p449 = scmp.le.s32.totalorder 1, %s28
      %p450 = scmp.lt.s32.totalorder %s28, 9
      %p451 = pnand %p449, %p450
      %p452 = pneg %p451
      // Predicated region
      $region45: #{tpu_custom_call.1} parent=5 // pred_check
        _
      $region46: #{tpu_custom_call.1} parent=5 // pred_check_branch
        %454 = sbr.rel (%p451) target = $region48
      $region47: #{tpu_custom_call.1} parent=5 // pred_region
        %s455 = ssub.s32 %s28, 1
        %s456 = sand.u32 %s62, 1
        %s457 = scalar_lea.sflag [#allocation6], %s456
        %s458 = sand.u32 %s62, 1
        %s459 = smul.addr %s458, 16
        %s460 = scalar_lea.vmem [#allocation5], %s459
        // Predicated region
        $region49: #{tpu_custom_call.1} parent=47 // pred_check
          %p461 = pneg %p75
        $region50: #{tpu_custom_call.1} parent=47 // pred_check_branch
          %463 = sbr.rel (%p461) target = $region52
        $region51: #{tpu_custom_call.1} parent=47 // pred_region
          %464 = dma.done %s457, 256
        $region52: #{tpu_custom_call.1} parent=47 // pred_fallthru
          _
        %s465 = sand.u32 %s33, 1
        %s466 = scalar_lea.sflag [#allocation9], %s465
        %s467 = sand.u32 %s92, 1
        %s468 = smul.addr %s467, 16
        %s469 = scalar_lea.vmem [#allocation8], %s468
        // Predicated region
        $region53: #{tpu_custom_call.1} parent=47 // pred_check
          %p470 = pneg %p105
        $region54: #{tpu_custom_call.1} parent=47 // pred_check_branch
          %472 = sbr.rel (%p470) target = $region56
        $region55: #{tpu_custom_call.1} parent=47 // pred_region
          %473 = dma.done %s466, 256
        $region56: #{tpu_custom_call.1} parent=47 // pred_fallthru
          _
        %s474 = sand.u32 %s33, 1
        %s475 = scalar_lea.sflag [#allocation9], %s474
        %s476 = sand.u32 %s122, 1
        %s477 = smul.addr %s476, 16
        %s478 = scalar_lea.vmem [#allocation10], %s477
        // Predicated region
        $region57: #{tpu_custom_call.1} parent=47 // pred_check
          %p479 = pneg %p135
        $region58: #{tpu_custom_call.1} parent=47 // pred_check_branch
          %481 = sbr.rel (%p479) target = $region60
        $region59: #{tpu_custom_call.1} parent=47 // pred_region
          %482 = dma.done %s475, 256
        $region60: #{tpu_custom_call.1} parent=47 // pred_fallthru
          _
        %s483 = sand.u32 %s33, 1
        %s484 = scalar_lea.sflag [#allocation12], %s483
        %s485 = sand.u32 %s150, 1
        %s486 = smul.addr %s485, 16
        %s487 = scalar_lea.vmem [#allocation11], %s486
        // Predicated region
        $region61: #{tpu_custom_call.1} parent=47 // pred_check
          %p488 = pneg %p163
        $region62: #{tpu_custom_call.1} parent=47 // pred_check_branch
          %490 = sbr.rel (%p488) target = $region64
        $region63: #{tpu_custom_call.1} parent=47 // pred_region
          %491 = dma.done %s484, 256
        $region64: #{tpu_custom_call.1} parent=47 // pred_fallthru
          _
        %s492 = sand.u32 %s33, 1
        %s493 = scalar_lea.sflag [#allocation12], %s492
        %s494 = sand.u32 %s180, 1
        %s495 = scalar_lea.vmem [#allocation13], %s494
        // Predicated region
        $region65: #{tpu_custom_call.1} parent=47 // pred_check
          %p496 = pneg %p193
        $region66: #{tpu_custom_call.1} parent=47 // pred_check_branch
          %498 = sbr.rel (%p496) target = $region68
        $region67: #{tpu_custom_call.1} parent=47 // pred_region
          %499 = dma.done %s493, 16
        $region68: #{tpu_custom_call.1} parent=47 // pred_fallthru
          _
        %s500 = sand.u32 %s33, 1
        %s501 = scalar_lea.sflag [#allocation15], %s500
        %s502 = sand.u32 %s210, 1
        %s503 = scalar_lea.vmem [#allocation14], %s502
        // Predicated region
        $region69: #{tpu_custom_call.1} parent=47 // pred_check
          %p504 = pneg %p223
        $region70: #{tpu_custom_call.1} parent=47 // pred_check_branch
          %506 = sbr.rel (%p504) target = $region72
        $region71: #{tpu_custom_call.1} parent=47 // pred_region
          %507 = dma.done %s501, 16
        $region72: #{tpu_custom_call.1} parent=47 // pred_fallthru
          _
        %s508 = sand.u32 %s33, 1
        %s509 = scalar_lea.sflag [#allocation15], %s508
        %s510 = sand.u32 %s236, 1
        %s511 = scalar_lea.vmem [#allocation16], %s510
        // Predicated region
        $region73: #{tpu_custom_call.1} parent=47 // pred_check
          %p512 = pneg %p249
        $region74: #{tpu_custom_call.1} parent=47 // pred_check_branch
          %514 = sbr.rel (%p512) target = $region76
        $region75: #{tpu_custom_call.1} parent=47 // pred_region
          %515 = dma.done %s509, 16
        $region76: #{tpu_custom_call.1} parent=47 // pred_fallthru
          _
        %s516 = sand.u32 %s62, 1
        %s517 = scalar_lea.sflag [#allocation6], %s516
        %s518 = sand.u32 %s62, 1
        %s519 = smul.addr %s518, 16
        %s520 = scalar_lea.vmem [#allocation5], %s519
        %p521 = pneg %p75
        %p522 = pneg %p72
        %s523 = sand.u32 %s33, 1
        %s524 = scalar_lea.sflag [#allocation9], %s523
        %s525 = sand.u32 %s92, 1
        %s526 = smul.addr %s525, 16
        %s527 = scalar_lea.vmem [#allocation8], %s526
        %p528 = pneg %p105
        %p529 = pneg %p102
        %s530 = sand.u32 %s33, 1
        %s531 = scalar_lea.sflag [#allocation9], %s530
        %s532 = sand.u32 %s122, 1
        %s533 = smul.addr %s532, 16
        %s534 = scalar_lea.vmem [#allocation10], %s533
        %p535 = pneg %p135
        %p536 = pneg %p132
        %s537 = sand.u32 %s33, 1
        %s538 = scalar_lea.sflag [#allocation12], %s537
        %s539 = sand.u32 %s150, 1
        %s540 = smul.addr %s539, 16
        %s541 = scalar_lea.vmem [#allocation11], %s540
        %p542 = pneg %p163
        %p543 = pneg %p160
        %s544 = sand.u32 %s33, 1
        %s545 = scalar_lea.sflag [#allocation12], %s544
        %s546 = sand.u32 %s180, 1
        %s547 = scalar_lea.vmem [#allocation13], %s546
        %p548 = pneg %p193
        %p549 = pneg %p190
        %s550 = sand.u32 %s33, 1
        %s551 = scalar_lea.sflag [#allocation15], %s550
        %s552 = sand.u32 %s210, 1
        %s553 = scalar_lea.vmem [#allocation14], %s552
        %p554 = pneg %p223
        %p555 = pneg %p220
        %s556 = sand.u32 %s33, 1
        %s557 = scalar_lea.sflag [#allocation15], %s556
        %s558 = sand.u32 %s236, 1
        %s559 = scalar_lea.vmem [#allocation16], %s558
        %p560 = pneg %p249
        %p561 = pneg %p246
        %p562 = pneg %p277
        %p563 = pneg %p274
        %s564 = sand.u32 %s264, 1
        %s565 = scalar_lea.sflag [#allocation7], %s564
        %s566 = sand.u32 %s264, 1
        %s567 = smul.addr %s566, 16
        %s568 = scalar_lea.vmem [#allocation17], %s567
        %s569 = smul.u32 2, %s40
        %s570 = smul.u32 2, %s40
        %p571 = scmp.eq.s32.totalorder %s40, 0
        // Predicated region
        $region77: #{tpu_custom_call.1} parent=47 // pred_check
          %p572 = pneg %p571
        $region78: #{tpu_custom_call.1} parent=47 // pred_check_branch
          %574 = sbr.rel (%p572) target = $region80
        $region79: #{tpu_custom_call.1} parent=47 // pred_region
          %vm575 = vcmask 7168
          %576 = vst.msk [vmem:[#allocation2] sm:$0xff] %vm575, -inf
          %577 = vst.msk [vmem:[#allocation2 + $0x8] sm:$0xff] %vm575, -inf
          %578 = vst.msk [vmem:[#allocation3] sm:$0xff] %vm575, 0.0
          %579 = vst.msk [vmem:[#allocation3 + $0x8] sm:$0xff] %vm575, 0.0
          %vm580 = vcmask 64512
          %581 = vst.msk [vmem:[#allocation4] sm:$0xff] %vm580, 0.0
          %582 = vst.msk [vmem:[#allocation4 + $0x8] sm:$0xff] %vm580, 0.0
        $region80: #{tpu_custom_call.1} parent=47 // pred_fallthru
          _
        %v583 = vld [vmem:[%s460] sm:$0xff]
        %v584 = vld [vmem:[%s460 + $0x8] sm:$0xff]
        %v585 = vld [vmem:[%s469] sm:$0xff]
        %v586 = vld [vmem:[%s469 + $0x8] sm:$0xff]
        %v587 = vld [vmem:[%s478] sm:$0xff]
        %v588 = vld [vmem:[%s478 + $0x8] sm:$0xff]
        %v589 = vld [vmem:[%s487] sm:$0xff]
        %v590 = vld [vmem:[%s487 + $0x8] sm:$0xff]
        %v591 = vld [vmem:[%s495] sm:$0x1]
        %v592 = vld [vmem:[%s503] sm:$0x1]
        %v593 = vlaneseq
        %v594 = vshrl.u32 %v593, 7
        %v595 = vadd.s32 %v594, 8
        %v596 = vlaneseq
        %v597 = vand.u32 %v596, 127
        %s598 = smul.u32 %s40, 16
        %v599 = vstv %s598
        %v600 = vadd.s32 %v597, %v599
        %vm601 = vcmp.le.s32.totalorder %v600, %v594
        %vm602 = vcmp.le.s32.totalorder %v600, %v595
        %604 = vset.pattern.permute.xlu0 0
        %605 = vperm.xlu0 %604, %v589
        %v606 = vpop.permute.xlu0 %605
        %609 = vset.pattern.permute.xlu0 0
        %610 = vperm.xlu0 %609, %v590
        %v611 = vpop.permute.xlu0 %610
        %v614 = vlaneseq
        %v615 = vshrl.u32 %v614, 7
        %v616 = vsub.s32 0, %v615
        %v617 = vrot.slane %v591, %v616
        %v619 = vsub.f32 %v606, %v617
        %v620 = vsub.f32 %v611, %v617
        %v622 = vlaneseq
        %v623 = vshrl.u32 %v622, 7
        %v624 = vsub.s32 0, %v623
        %v625 = vrot.slane %v592, %v624
        %v627 = vadd.f32 %v619, %v625
        %v628 = vadd.f32 %v620, %v625
        %v629 = vsel %vm601, %v627, -inf
        %v630 = vsel %vm602, %v628, -inf
        %v631 = vld [vmem:[#allocation2] sm:$0xff]
        %v632 = vld [vmem:[#allocation2 + $0x8] sm:$0xff]
        %vm633 = vcmask 130048
        %v634 = vsel %vm633, %v629, -inf
        %635 = vmax.xlane.f32.xlu0 %v634
        %v636 = vpop.xlane.xlu0 %635
        %v637 = vsel %vm633, %v630, -inf
        %638 = vmax.xlane.f32.xlu0 %v637
        %v639 = vpop.xlane.xlu0 %638
        %v640 = vmax.f32 %v631, %v636
        %v641 = vmax.f32 %v632, %v639
        %v642 = vsub.f32 %v631, %v640
        %v643 = vsub.f32 %v632, %v641
        %v644 = vmul.f32 %v642, 1.442695
        %v645 = vpow.pop %v644
        %v646 = vmul.f32 %v643, 1.442695
        %v647 = vpow.pop %v646
        %649 = vset.pattern.permute.xlu0 0
        %650 = vperm.xlu0 %649, %v640
        %v651 = vpop.permute.xlu0 %650
        %654 = vset.pattern.permute.xlu0 0
        %655 = vperm.xlu0 %654, %v641
        %v656 = vpop.permute.xlu0 %655
        %v658 = vsub.f32 %v629, %v651
        %v659 = vsub.f32 %v630, %v656
        %v660 = vmul.f32 %v658, 1.442695
        %v661 = vpow.pop %v660
        %v662 = vmul.f32 %v659, 1.442695
        %v663 = vpow.pop %v662
        %vm664 = vcmask 64512
        %v666 = vsel %vm664, %v583, 0
        %v669 = vsel %vm664, %v584, 0
        %v672 = vsel %vm664, %v585, 0
        %v675 = vsel %vm664, %v586, 0
        %677 = vmatprep.subr.mxu0 0.0
        %678 = vmatpush1.xpose.msra.mxu0 %v672
        %679 = vmatprep.subr.mxu0 0.0
        %680 = vmatpush1.xpose.msra.mxu0 %v675
        %681 = vmatprep.subr.mxu0 0.0
        %682 = vmatpush1.xpose.msra.mxu0 0.0
        %683 = vmatprep.subr.mxu0 0.0
        %684 = vmatpush1.xpose.msra.mxu0 0.0
        %685 = vmatprep.subr.mxu0 0.0
        %686 = vmatpush1.xpose.msra.mxu0 0.0
        %687 = vmatprep.subr.mxu0 0.0
        %688 = vmatpush1.xpose.msra.mxu0 0.0
        %689 = vmatprep.subr.mxu0 0.0
        %690 = vmatpush1.xpose.msra.mxu0 0.0
        %691 = vmatprep.subr.mxu0 0.0
        %692 = vmatpush1.xpose.msra.mxu0 0.0
        %693 = vmatprep.subr.mxu0 0.0
        %694 = vmatpush1.xpose.msra.mxu0 0.0
        %695 = vmatprep.subr.mxu0 0.0
        %696 = vmatpush1.xpose.msra.mxu0 0.0
        %697 = vmatprep.subr.mxu0 0.0
        %698 = vmatpush1.xpose.msra.mxu0 0.0
        %699 = vmatprep.subr.mxu0 0.0
        %700 = vmatpush1.xpose.msra.mxu0 0.0
        %701 = vmatprep.subr.mxu0 0.0
        %702 = vmatpush1.xpose.msra.mxu0 0.0
        %703 = vmatprep.subr.mxu0 0.0
        %704 = vmatpush1.xpose.msra.mxu0 0.0
        %705 = vmatprep.subr.mxu0 0.0
        %706 = vmatpush1.xpose.msra.mxu0 0.0
        %707 = vmatprep.subr.mxu0 0.0
        %708 = vmatpush1.xpose.msra.mxu0 0.0
        %709 = vmatprep.subr.mxu0 0.0
        %710 = vmatpush1.xpose.msra.mxu0 0.0
        %711 = vmatprep.subr.mxu0 0.0
        %712 = vmatpush1.xpose.msra.mxu0 0.0
        %713 = vmatprep.subr.mxu0 0.0
        %714 = vmatpush1.xpose.msra.mxu0 0.0
        %715 = vmatprep.subr.mxu0 0.0
        %716 = vmatpush1.xpose.msra.mxu0 0.0
        %717 = vmatprep.subr.mxu0 0.0
        %718 = vmatpush1.xpose.msra.mxu0 0.0
        %719 = vmatprep.subr.mxu0 0.0
        %720 = vmatpush1.xpose.msra.mxu0 0.0
        %721 = vmatprep.subr.mxu0 0.0
        %722 = vmatpush1.xpose.msra.mxu0 0.0
        %723 = vmatprep.subr.mxu0 0.0
        %724 = vmatpush1.xpose.msra.mxu0 0.0
        %725 = vmatprep.subr.mxu0 0.0
        %726 = vmatpush1.xpose.msra.mxu0 0.0
        %727 = vmatprep.subr.mxu0 0.0
        %728 = vmatpush1.xpose.msra.mxu0 0.0
        %729 = vmatprep.subr.mxu0 0.0
        %730 = vmatpush1.xpose.msra.mxu0 0.0
        %731 = vmatprep.subr.mxu0 0.0
        %732 = vmatpush1.xpose.msra.mxu0 0.0
        %733 = vmatprep.subr.mxu0 0.0
        %734 = vmatpush1.xpose.msra.mxu0 0.0
        %735 = vmatprep.subr.mxu0 0.0
        %736 = vmatpush1.xpose.msra.mxu0 0.0
        %737 = vmatprep.subr.mxu0 0.0
        %738 = vmatpush1.xpose.msra.mxu0 0.0
        %739 = vmatprep.subr.mxu0 0.0
        %740 = vmatpush1.xpose.msra.mxu0 0.0
        %741 = vmatprep.mubr.f32.mxu0 0.0
        %742 = vmatmul.mubr.f32.gmra.mrb[0].mxu0 %v666
        %v743 = vpop.f32.mrb[0].mxu0
        %v744 = vadd.f32 0.0, %v743
        %v745 = vpop.f32.mrb[0].mxu0
        %746 = vmatprep.mubr.f32.mxu0 0.0
        %747 = vmatmul.mubr.f32.gmra.mrb[0].mxu0 %v669
        %v748 = vpop.f32.mrb[0].mxu0
        %v749 = vadd.f32 0.0, %v748
        %v750 = vpop.f32.mrb[0].mxu0
        %751 = vdwg.mxu0
        %v752 = vmul.f32 %v744, 0.35355338
        %v753 = vmul.f32 %v749, 0.35355338
        %v754 = vmul.f32 %v752, %v661
        %v755 = vmul.f32 %v753, %v663
        %v756 = vld [vmem:[#allocation3] sm:$0xff]
        %v757 = vld [vmem:[#allocation3 + $0x8] sm:$0xff]
        %v758 = vmul.f32 %v645, %v756
        %v759 = vmul.f32 %v647, %v757
        %v760 = vsel %vm633, %v754, 0.0
        %761 = vadd.xlane.f32.xlu0 %v760
        %v762 = vpop.xlane.xlu0 %761
        %v763 = vsel %vm633, %v755, 0.0
        %764 = vadd.xlane.f32.xlu0 %v763
        %v765 = vpop.xlane.xlu0 %764
        %v766 = vadd.f32 %v758, %v762
        %v767 = vadd.f32 %v759, %v765
        %vm768 = vcmask 7168
        %769 = vst.msk [vmem:[#allocation3] sm:$0xff] %vm768, %v766
        %770 = vst.msk [vmem:[#allocation3 + $0x8] sm:$0xff] %vm768, %v767
        %v771 = vld [vmem:[#allocation4] sm:$0xff]
        %v772 = vld [vmem:[#allocation4 + $0x8] sm:$0xff]
        %774 = vset.pattern.permute.xlu0 0
        %775 = vperm.xlu0 %774, %v645
        %v776 = vpop.permute.xlu0 %775
        %779 = vset.pattern.permute.xlu0 0
        %780 = vperm.xlu0 %779, %v647
        %v781 = vpop.permute.xlu0 %780
        %v783 = vmul.f32 %v776, %v771
        %v784 = vmul.f32 %v781, %v772
        %v786 = vsel %vm633, %v754, 0
        %v789 = vsel %vm633, %v755, 0
        %791 = vmatprep.subr.mxu0 0.0
        %792 = vmatpush1.msra.mxu0 %v587
        %793 = vmatprep.subr.mxu0 0.0
        %794 = vmatpush1.msra.mxu0 %v588
        %795 = vmatprep.subr.mxu0 0.0
        %796 = vmatpush1.msra.mxu0 0.0
        %797 = vmatprep.subr.mxu0 0.0
        %798 = vmatpush1.msra.mxu0 0.0
        %799 = vmatprep.subr.mxu0 0.0
        %800 = vmatpush1.msra.mxu0 0.0
        %801 = vmatprep.subr.mxu0 0.0
        %802 = vmatpush1.msra.mxu0 0.0
        %803 = vmatprep.subr.mxu0 0.0
        %804 = vmatpush1.msra.mxu0 0.0
        %805 = vmatprep.subr.mxu0 0.0
        %806 = vmatpush1.msra.mxu0 0.0
        %807 = vmatprep.subr.mxu0 0.0
        %808 = vmatpush1.msra.mxu0 0.0
        %809 = vmatprep.subr.mxu0 0.0
        %810 = vmatpush1.msra.mxu0 0.0
        %811 = vmatprep.subr.mxu0 0.0
        %812 = vmatpush1.msra.mxu0 0.0
        %813 = vmatprep.subr.mxu0 0.0
        %814 = vmatpush1.msra.mxu0 0.0
        %815 = vmatprep.subr.mxu0 0.0
        %816 = vmatpush1.msra.mxu0 0.0
        %817 = vmatprep.subr.mxu0 0.0
        %818 = vmatpush1.msra.mxu0 0.0
        %819 = vmatprep.subr.mxu0 0.0
        %820 = vmatpush1.msra.mxu0 0.0
        %821 = vmatprep.subr.mxu0 0.0
        %822 = vmatpush1.msra.mxu0 0.0
        %823 = vmatprep.subr.mxu0 0.0
        %824 = vmatpush1.msra.mxu0 0.0
        %825 = vmatprep.subr.mxu0 0.0
        %826 = vmatpush1.msra.mxu0 0.0
        %827 = vmatprep.subr.mxu0 0.0
        %828 = vmatpush1.msra.mxu0 0.0
        %829 = vmatprep.subr.mxu0 0.0
        %830 = vmatpush1.msra.mxu0 0.0
        %831 = vmatprep.subr.mxu0 0.0
        %832 = vmatpush1.msra.mxu0 0.0
        %833 = vmatprep.subr.mxu0 0.0
        %834 = vmatpush1.msra.mxu0 0.0
        %835 = vmatprep.subr.mxu0 0.0
        %836 = vmatpush1.msra.mxu0 0.0
        %837 = vmatprep.subr.mxu0 0.0
        %838 = vmatpush1.msra.mxu0 0.0
        %839 = vmatprep.subr.mxu0 0.0
        %840 = vmatpush1.msra.mxu0 0.0
        %841 = vmatprep.subr.mxu0 0.0
        %842 = vmatpush1.msra.mxu0 0.0
        %843 = vmatprep.subr.mxu0 0.0
        %844 = vmatpush1.msra.mxu0 0.0
        %845 = vmatprep.subr.mxu0 0.0
        %846 = vmatpush1.msra.mxu0 0.0
        %847 = vmatprep.subr.mxu0 0.0
        %848 = vmatpush1.msra.mxu0 0.0
        %849 = vmatprep.subr.mxu0 0.0
        %850 = vmatpush1.msra.mxu0 0.0
        %851 = vmatprep.subr.mxu0 0.0
        %852 = vmatpush1.msra.mxu0 0.0
        %853 = vmatprep.subr.mxu0 0.0
        %854 = vmatpush1.msra.mxu0 0.0
        %855 = vmatprep.mubr.f32.mxu0 0.0
        %856 = vmatmul.mubr.f32.gmra.mrb[0].mxu0 %v786
        %v857 = vpop.f32.mrb[0].mxu0
        %v858 = vadd.f32 0.0, %v857
        %v859 = vpop.f32.mrb[0].mxu0
        %860 = vmatprep.mubr.f32.mxu0 0.0
        %861 = vmatmul.mubr.f32.gmra.mrb[0].mxu0 %v789
        %v862 = vpop.f32.mrb[0].mxu0
        %v863 = vadd.f32 0.0, %v862
        %v864 = vpop.f32.mrb[0].mxu0
        %865 = vdwg.mxu0
        %v866 = vadd.f32 %v783, %v858
        %v867 = vadd.f32 %v784, %v863
        %868 = vst.msk [vmem:[#allocation4] sm:$0xff] %vm664, %v866
        %869 = vst.msk [vmem:[#allocation4 + $0x8] sm:$0xff] %vm664, %v867
        %870 = vst.msk [vmem:[#allocation2] sm:$0xff] %vm768, %v640
        %871 = vst.msk [vmem:[#allocation2 + $0x8] sm:$0xff] %vm768, %v641
        // Predicated region
        $region81: #{tpu_custom_call.1} parent=47 // pred_check
          %p872 = pneg %p571
        $region82: #{tpu_custom_call.1} parent=47 // pred_check_branch
          %874 = sbr.rel (%p872) target = $region84
        $region83: #{tpu_custom_call.1} parent=47 // pred_region
          %v875 = vld [vmem:[#allocation3] sm:$0xff]
          %v876 = vld [vmem:[#allocation3 + $0x8] sm:$0xff]
          %v877 = vand.u32 2147483647, %v875
          %v878 = vand.u32 2147483647, %v876
          %v879 = vld [vmem:[#allocation2] sm:$0xff]
          %v880 = vld [vmem:[#allocation2 + $0x8] sm:$0xff]
          %v881 = vsub.f32 0.0, %v879
          %v882 = vsub.f32 0.0, %v880
          %v883 = vmul.f32 %v881, 1.442695
          %v884 = vpow.pop %v883
          %v885 = vmul.f32 %v882, 1.442695
          %v886 = vpow.pop %v885
          %v887 = vmax.f32 %v877, %v884
          %v888 = vmax.f32 %v878, %v886
          %v889 = vadd.f32 %v887, 1e-06
          %v890 = vadd.f32 %v888, 1e-06
          %v891 = vrcp.pop %v889
          %v892 = vrcp.pop %v890
          %v893 = vld [vmem:[#allocation4] sm:$0xff]
          %v894 = vld [vmem:[#allocation4 + $0x8] sm:$0xff]
          %896 = vset.pattern.permute.xlu0 0
          %897 = vperm.xlu0 %896, %v891
          %v898 = vpop.permute.xlu0 %897
          %901 = vset.pattern.permute.xlu0 0
          %902 = vperm.xlu0 %901, %v892
          %v903 = vpop.permute.xlu0 %902
          %v905 = vmul.f32 %v893, %v898
          %v906 = vmul.f32 %v894, %v903
          %v907 = vsel %vm664, %v905, 0.0
          %908 = vadd.xlane.f32.xlu0 %v907
          %v909 = vpop.xlane.xlu0 %908
          %v910 = vsel %vm664, %v906, 0.0
          %911 = vadd.xlane.f32.xlu0 %v910
          %v912 = vpop.xlane.xlu0 %911
          %v913 = vrcp.pop 8.0
          %v914 = vmul.f32 %v909, %v913
          %v915 = vmul.f32 %v912, %v913
          %v916 = vsub.f32 %v905, %v914
          %v917 = vsub.f32 %v906, %v915
          %v918 = vmul.f32 %v916, %v916
          %v919 = vmul.f32 %v917, %v917
          %v920 = vsel %vm664, %v918, 0.0
          %921 = vadd.xlane.f32.xlu0 %v920
          %v922 = vpop.xlane.xlu0 %921
          %v923 = vsel %vm664, %v919, 0.0
          %924 = vadd.xlane.f32.xlu0 %v923
          %v925 = vpop.xlane.xlu0 %924
          %v926 = vmul.f32 %v922, %v913
          %v927 = vmul.f32 %v925, %v913
          %v928 = vadd.f32 %v926, 1e-05
          %v929 = vadd.f32 %v927, 1e-05
          %v930 = vrsqrt.pop %v928
          %v931 = vrsqrt.pop %v929
          %v932 = vmul.f32 %v916, %v930
          %v933 = vmul.f32 %v917, %v931
          %v934 = vld [vmem:[%s511] sm:$0x1]
          %v936 = vlaneseq
          %v937 = vshrl.u32 %v936, 7
          %v938 = vsub.s32 0, %v937
          %v939 = vrot.slane %v934, %v938
          %v941 = vmul.f32 %v932, %v939
          %v942 = vmul.f32 %v933, %v939
          %943 = vst.msk [vmem:[%s568] sm:$0xff] %vm664, %v941
          %944 = vst.msk [vmem:[%s568 + $0x8] sm:$0xff] %vm664, %v942
        $region84: #{tpu_custom_call.1} parent=47 // pred_fallthru
          _
        %s945 = sand.u32 %s264, 1
        %s946 = scalar_lea.sflag [#allocation7], %s945
        %s947 = sand.u32 %s264, 1
        %s948 = smul.addr %s947, 16
        %s949 = scalar_lea.vmem [#allocation17], %s948
        // Predicated region
        $region85: #{tpu_custom_call.1} parent=47 // pred_check
          %p950 = pneg %p274
        $region86: #{tpu_custom_call.1} parent=47 // pred_check_branch
          %952 = sbr.rel (%p950) target = $region88
        $region87: #{tpu_custom_call.1} parent=47 // pred_region
          %s954 = ssub.s32 256, 256
          %955 = vsyncadd %s946, %s954
          %s956 = smul.addr %s39, 2
          %s957 = smul.addr %s38, 8
          %s958 = sadd.s32 %s956, %s957
          %s959 = smul.addr %s958, 128
          %s960 = scalar_lea.hbm %s7, %s959
          %s961 = sshll.u32 %s949, 4
          %s962 = int_to_ptr.vmem [resolvable:$true] %s961
          %967 = dma.vmem_to_hbm [thread:$0]  %s962, 256, %s960, %s946, 128, 128, 8
        $region88: #{tpu_custom_call.1} parent=47 // pred_fallthru
          _
      $region48: #{tpu_custom_call.1} parent=5 // pred_fallthru
        _
      %p968 = scmp.le.s32.totalorder 2, %s28
      // Predicated region
      $region89: #{tpu_custom_call.1} parent=5 // pred_check
        %p969 = pneg %p968
      $region90: #{tpu_custom_call.1} parent=5 // pred_check_branch
        %971 = sbr.rel (%p969) target = $region92
      $region91: #{tpu_custom_call.1} parent=5 // pred_region
        %s972 = ssub.s32 %s28, 2
        // Predicated region
        $region93: #{tpu_custom_call.1} parent=91 // pred_check
          %p973 = pneg %p280
        $region94: #{tpu_custom_call.1} parent=91 // pred_check_branch
          %975 = sbr.rel (%p973) target = $region96
        $region95: #{tpu_custom_call.1} parent=91 // pred_region
          %s976 = sand.u32 %s265, 1
          %s977 = scalar_lea.sflag [#allocation7], %s976
          %s978 = sand.u32 %s265, 1
          %s979 = smul.addr %s978, 16
          %s980 = scalar_lea.vmem [#allocation17], %s979
          %981 = dma.done %s977, 256
        $region96: #{tpu_custom_call.1} parent=91 // pred_fallthru
          _
      $region92: #{tpu_custom_call.1} parent=5 // pred_fallthru
        _
    $region6: #{tpu_custom_call.1} parent=1 // loop_footer
      %s32 = sadd.s32 1, %s28
    $region7: #{tpu_custom_call.1} parent=1 // loop_footer_branch
      %27 = sbr.rel target = $region3
    $region8: #{tpu_custom_call.1} parent=1 // loop_exit
      _
    %982 = vsyncpa [#allocation6], 1
    %s983 = scalar_lea.sflag [#allocation6], 1
    %984 = vsyncpa %s983, 1
    %985 = vsyncpa [#allocation9], 1
    %s986 = scalar_lea.sflag [#allocation9], 1
    %987 = vsyncpa %s986, 1
    %988 = vsyncpa [#allocation12], 1
    %s989 = scalar_lea.sflag [#allocation12], 1
    %990 = vsyncpa %s989, 1
    %991 = vsyncpa [#allocation15], 1
    %s992 = scalar_lea.sflag [#allocation15], 1
    %993 = vsyncpa %s992, 1
    %994 = vsyncpa [#allocation7], 1
    %s995 = scalar_lea.sflag [#allocation7], 1
    %996 = vsyncpa %s995, 1

</llo_original>
